<compile_context>
chip_gen: v6e
topology: v6e:2x2x1
jax: 0.10.0
libtpu: 0.0.40
codegen_flags: <defaults>
</compile_context>

<pallas_src>
import jax
import jax.numpy as jnp
from jax.experimental import pallas as pl
from jax.experimental.pallas import tpu as pltpu

# ---- model sizes (small, forward-consistent) -------------------------------------------
B = 2            # batch
T = 8            # timesteps fused into one kernel call
N_PRE = 32       # n_presynapses
N_NEU = 32       # n_neurons
PERCENT = 0.5    # excitatory fraction
SPARSITY = 0.3   # fraction of weights kept by the mask
N_EXC = int(N_NEU * PERCENT)

ALPHA = 0.9      # LIF membrane decay
V_TH = 0.5       # LIF threshold

# ---- TPU-friendly padded shapes ---------------------------------------------------------
# B_PAD: per-step batch tile.  For a deployed batch > 2, size this to the real batch
# rounded up to 8 instead of hard-coding 8 (MXU row / VPU sublane occupancy scales with it).
B_PAD = max(8, ((B + 7) // 8) * 8)
NP_PAD = 128     # presynapse axis padded to a full lane width
NN_PAD = 128     # neuron axis padded to a full lane width -> dense vst, not masked vst.msk

# MXU input dtype.  bf16 is MXU-native on v5e / v6e / v7x (f32 inputs force a multi-pass
# decomposition).  Accumulation (preferred_element_type) and LIF math are always f32.
MATMUL_DTYPE = jnp.bfloat16


# ---- fused Pallas kernel: one batched ih matmul + unrolled per-step recurrent hh + LIF ---
def ei_fused_kernel(x_ref, wih_ref, bias_ref, whh_ref, sign_ref,
                    spikes_ref, vfinal_ref):
    # Batched input-path matmul over ALL timesteps at once:
    # (T*B_PAD, NP_PAD) @ (NP_PAD, NN_PAD), bf16 in / f32 accumulate.
    # bias_ref already holds b_ih for row-block 0 and (b_ih + b_hh) for row-blocks 1..T-1.
    hin = (jnp.dot(x_ref[...], wih_ref[...], preferred_element_type=jnp.float32)
           + bias_ref[...])                                       # (T*B_PAD, NN_PAD) f32

    whh = whh_ref[...]                                            # (NN_PAD, NN_PAD) bf16
    sign = sign_ref[...]                                          # (1, NN_PAD)      f32

    # ---- t = 0, peeled: h_last is 0, recurrent path skipped (as in the PyTorch module) ---
    h = hin[0:B_PAD, :]
    v = h                                                         # alpha * 0 + h
    spike = (v >= V_TH).astype(jnp.float32)
    v = v - spike * V_TH                                          # soft reset
    signed = spike * sign
    spikes_ref[pl.ds(0, B_PAD), :] = signed
    h_last = signed.astype(MATMUL_DTYPE)                          # spikes are exact in bf16

    # ---- t = 1 .. T-1, compile-time-unrolled straight-line recurrence ---------------------
    for t in range(1, T):
        row = t * B_PAD                                           # static
        h = hin[row:row + B_PAD, :] + jnp.dot(
            h_last, whh, preferred_element_type=jnp.float32)
        # dropout(p=0.1) is identity in eval mode.
        v = ALPHA * v + h
        spike = (v >= V_TH).astype(jnp.float32)
        v = v - spike * V_TH
        signed = spike * sign
        spikes_ref[pl.ds(row, B_PAD), :] = signed                 # lane-dense 128-wide store
        h_last = signed.astype(MATMUL_DTYPE)

    vfinal_ref[...] = v


def ei_block_forward(x_seq, W_ih, M_ih, b_ih, W_hh, M_hh, b_hh, sign):
    """Runs all T timesteps of ExcitatoryInhibitoryBlock (eval mode) in ONE pallas_call.

    Returns (spikes_exc[T,B,N_EXC], spikes_inh[T,B,N_INH], spikes[T,B,N_NEU], v_final[B,N_NEU]).
    """
    # Eval-mode preprocessing hoisted out of the kernel (weights are frozen):
    #  - non-negativity (|W|) and sparsity mask applied once,
    #  - transposed to [in, out] so the kernel does x @ W with no in-kernel .T,
    #  - zero-padded to lane-dense / sublane-aligned shapes (padded rows/cols contribute 0).
    wih_eff = (jnp.abs(W_ih) * M_ih).T.astype(MATMUL_DTYPE)     # (N_PRE, N_NEU)
    whh_eff = (jnp.abs(W_hh) * M_hh).T.astype(MATMUL_DTYPE)     # (N_NEU, N_NEU)

    wih_p = jnp.zeros((NP_PAD, NN_PAD), MATMUL_DTYPE).at[:N_PRE, :N_NEU].set(wih_eff)
    whh_p = jnp.zeros((NN_PAD, NN_PAD), MATMUL_DTYPE).at[:N_NEU, :N_NEU].set(whh_eff)
    sign_p = jnp.zeros((1, NN_PAD), jnp.float32).at[:, :N_NEU].set(sign)

    # Bias slab: row-block 0 gets b_ih, row-blocks 1..T-1 get b_ih + b_hh (b_hh folded in
    # here so the per-step kernel path has no bias broadcast/add at all).
    bias_ih = jnp.zeros((NN_PAD,), jnp.float32).at[:N_NEU].set(b_ih[0])
    bias_ihhh = jnp.zeros((NN_PAD,), jnp.float32).at[:N_NEU].set(b_ih[0] + b_hh[0])
    bias_slab = jnp.concatenate(
        [jnp.broadcast_to(bias_ih, (B_PAD, NN_PAD)),
         jnp.broadcast_to(bias_ihhh, ((T - 1) * B_PAD, NN_PAD))], axis=0)

    x_p = jnp.zeros((T, B_PAD, NP_PAD), MATMUL_DTYPE).at[:, :B, :N_PRE].set(
        x_seq.astype(MATMUL_DTYPE))
    x_flat = x_p.reshape(T * B_PAD, NP_PAD)

    const2d = lambda i: (0, 0)   # grid=(1,): everything is VMEM-resident for the whole call
    spikes_flat, v_final_p = pl.pallas_call(
        ei_fused_kernel,
        out_shape=(jax.ShapeDtypeStruct((T * B_PAD, NN_PAD), jnp.float32),
                   jax.ShapeDtypeStruct((B_PAD, NN_PAD), jnp.float32)),
        grid=(1,),
        in_specs=[
            pl.BlockSpec((T * B_PAD, NP_PAD), const2d),   # x, all timesteps (bf16)
            pl.BlockSpec((NP_PAD, NN_PAD), const2d),      # W_ih_eff (pre-masked, transposed)
            pl.BlockSpec((T * B_PAD, NN_PAD), const2d),   # fused bias slab (f32)
            pl.BlockSpec((NN_PAD, NN_PAD), const2d),      # W_hh_eff
            pl.BlockSpec((1, NN_PAD), const2d),           # neuron_sign
        ],
        out_specs=[
            pl.BlockSpec((T * B_PAD, NN_PAD), const2d),   # spikes, all timesteps (lane-dense)
            pl.BlockSpec((B_PAD, NN_PAD), const2d),       # final membrane potential
        ],
        compiler_params=pltpu.CompilerParams(dimension_semantics=("arbitrary",)),
    )(x_flat, wih_p, bias_slab, whh_p, sign_p)

    spikes = spikes_flat.reshape(T, B_PAD, NN_PAD)[:, :B, :N_NEU]
    v_final = v_final_p[:B, :N_NEU]
    return spikes[:, :, :N_EXC], spikes[:, :, N_EXC:], spikes, v_final


# ---- deterministic parameter construction (mirrors __init__ of the PyTorch module) ------
def _orthogonal(key, shape):
    a = jax.random.normal(key, shape, dtype=jnp.float32)
    q, _ = jnp.linalg.qr(a)
    return q[: shape[0], : shape[1]]


def _make_sparse_linear(key, in_f, out_f, sparsity):
    k_orth, k_xav, k_b = jax.random.split(key, 3)
    # mask computed from the *orthogonal* init (as in NonNegSLinear.__init__) ...
    w_orth = _orthogonal(k_orth, (out_f, in_f))
    thresh = jnp.percentile(jnp.abs(w_orth), 100.0 * (1.0 - sparsity))
    mask = (jnp.abs(w_orth) >= thresh).astype(jnp.float32)
    # ... then the weight itself is re-initialized with xavier_uniform.
    bound = jnp.sqrt(6.0 / (in_f + out_f))
    w = jax.random.uniform(k_xav, (out_f, in_f), jnp.float32, -bound, bound)
    # PyTorch nn.Linear default bias init: U(-1/sqrt(fan_in), 1/sqrt(fan_in))
    b_bound = 1.0 / jnp.sqrt(jnp.float32(in_f))
    b = jax.random.uniform(k_b, (1, out_f), jnp.float32, -b_bound, b_bound)
    return w, mask, b


# ---- pure-JAX reference of the eval-mode forward (same LIF stand-in, same MXU dtype) -----
def reference_forward(x_seq, W_ih, M_ih, b_ih, W_hh, M_hh, b_hh, sign):
    # Matmul inputs quantized to MATMUL_DTYPE exactly as the kernel does (f32 accumulation),
    # so the spike / v_final comparison is apples-to-apples.
    wih = (jnp.abs(W_ih) * M_ih).astype(MATMUL_DTYPE)
    whh = (jnp.abs(W_hh) * M_hh).astype(MATMUL_DTYPE)
    xq = x_seq.astype(MATMUL_DTYPE)
    v = jnp.zeros((B, N_NEU), jnp.float32)
    h_last = jnp.zeros((B, N_NEU), jnp.float32)
    outs = []
    for t in range(T):
        h = jnp.dot(xq[t], wih.T, preferred_element_type=jnp.float32) + b_ih
        if t > 0:
            h = h + jnp.dot(h_last.astype(MATMUL_DTYPE), whh.T,
                            preferred_element_type=jnp.float32) + b_hh
        v = ALPHA * v + h
        spike = (v >= V_TH).astype(jnp.float32)
        v = v - spike * V_TH
        signed = spike * sign
        h_last = signed
        outs.append(signed)
    return jnp.stack(outs), v


if __name__ == "__main__":
    key = jax.random.PRNGKey(0)
    k_ih, k_hh, k_x = jax.random.split(key, 3)

    W_ih, M_ih, b_ih = _make_sparse_linear(k_ih, N_PRE, N_NEU, SPARSITY)
    W_hh, M_hh, b_hh = _make_sparse_linear(k_hh, N_NEU, N_NEU, SPARSITY)

    # neuron_sign: +1 for excitatory neurons, -1 for inhibitory neurons.
    sign = jnp.concatenate(
        [jnp.ones((1, N_EXC), jnp.float32),
         -jnp.ones((1, N_NEU - N_EXC), jnp.float32)], axis=1)

    # reset_state(): h_last = 0, membrane potential = 0 (done inside the fused kernel).
    x_seq = jax.random.normal(k_x, (T, B, N_PRE), dtype=jnp.float32)

    exc, inh, spikes, v_final = ei_block_forward(
        x_seq, W_ih, M_ih, b_ih, W_hh, M_hh, b_hh, sign)
    jax.block_until_ready((exc, inh, spikes, v_final))

    assert exc.shape == (T, B, N_EXC)
    assert inh.shape == (T, B, N_NEU - N_EXC)
    assert v_final.shape == (B, N_NEU)

    # Correctness check against the pure-JAX eval-mode reference (spikes AND final membrane).
    spikes_ref, v_ref = reference_forward(
        x_seq, W_ih, M_ih, b_ih, W_hh, M_hh, b_hh, sign)
    spike_mismatch = float(jnp.mean(jnp.abs(spikes - spikes_ref) > 0.5))
    # allow (extremely rare) threshold-boundary flips from accumulation-order differences
    assert spike_mismatch < 0.02, f"spike mismatch fraction = {spike_mismatch}"
    v_err = float(jnp.max(jnp.abs(v_final - v_ref)))
    assert v_err < 1e-2, f"v_final max abs error = {v_err}"

    print("KERNEL_OK")
</pallas_src>

<mosaic_0001>
module attributes {stable_mosaic.version = 11 : i64} {
  func.func @ei_fused_kernel(%arg0: i32, %arg1: memref<64x128xbf16, #tpu.memory_space<vmem>>, %arg2: memref<128x128xbf16, #tpu.memory_space<vmem>>, %arg3: memref<64x128xf32, #tpu.memory_space<vmem>>, %arg4: memref<128x128xbf16, #tpu.memory_space<vmem>>, %arg5: memref<1x128xf32, #tpu.memory_space<vmem>>, %arg6: memref<64x128xf32, #tpu.memory_space<vmem>>, %arg7: memref<8x128xf32, #tpu.memory_space<vmem>>) attributes {dimension_semantics = [#tpu.dimension_semantics<arbitrary>], iteration_bounds = array<i64: 1>, scalar_prefetch = 0 : i64, scratch_operands = 0 : i64, tpu.core_type = #tpu.core_type<tc>, window_params = [{pipeline_mode = #tpu.pipeline_mode<synchronous>, transform_indices = @transform_0, window_bounds = array<i64: 64, 128>}, {pipeline_mode = #tpu.pipeline_mode<synchronous>, transform_indices = @transform_1, window_bounds = array<i64: 128, 128>}, {pipeline_mode = #tpu.pipeline_mode<synchronous>, transform_indices = @transform_2, window_bounds = array<i64: 64, 128>}, {pipeline_mode = #tpu.pipeline_mode<synchronous>, transform_indices = @transform_3, window_bounds = array<i64: 128, 128>}, {pipeline_mode = #tpu.pipeline_mode<synchronous>, transform_indices = @transform_4, window_bounds = array<i64: 1, 128>}, {pipeline_mode = #tpu.pipeline_mode<synchronous>, transform_indices = @transform_5, window_bounds = array<i64: 64, 128>}, {pipeline_mode = #tpu.pipeline_mode<synchronous>, transform_indices = @transform_6, window_bounds = array<i64: 8, 128>}]} {
    %c0 = arith.constant 0 : index
    %c0_0 = arith.constant 0 : index
    %0 = vector.load %arg1[%c0, %c0_0] : memref<64x128xbf16, #tpu.memory_space<vmem>>, vector<64x128xbf16>
    %c0_1 = arith.constant 0 : index
    %c0_2 = arith.constant 0 : index
    %1 = vector.load %arg2[%c0_1, %c0_2] : memref<128x128xbf16, #tpu.memory_space<vmem>>, vector<128x128xbf16>
    %cst = arith.constant dense<0.000000e+00> : vector<64x128xf32>
    %2 = tpu.matmul %0, %1, %cst {dimension_numbers = #tpu.dot_dimension_numbers<[1], [0], [0], [1], [0, 0, 1, 1], [], []>} : vector<64x128xbf16>, vector<128x128xbf16>, vector<64x128xf32> -> vector<64x128xf32>
    %c0_3 = arith.constant 0 : index
    %c0_4 = arith.constant 0 : index
    %3 = vector.load %arg3[%c0_3, %c0_4] : memref<64x128xf32, #tpu.memory_space<vmem>>, vector<64x128xf32>
    %4 = arith.addf %2, %3 : vector<64x128xf32>
    %c0_5 = arith.constant 0 : index
    %c0_6 = arith.constant 0 : index
    %5 = vector.load %arg4[%c0_5, %c0_6] : memref<128x128xbf16, #tpu.memory_space<vmem>>, vector<128x128xbf16>
    %c0_7 = arith.constant 0 : index
    %c0_8 = arith.constant 0 : index
    %6 = vector.load %arg5[%c0_7, %c0_8] : memref<1x128xf32, #tpu.memory_space<vmem>>, vector<1x128xf32>
    %7 = vector.extract_strided_slice %4 {offsets = [0, 0], sizes = [8, 128], strides = [1, 1]} : vector<64x128xf32> to vector<8x128xf32>
    %cst_9 = arith.constant 5.000000e-01 : f32
    %8 = vector.broadcast %cst_9 : f32 to vector<8x128xf32>
    %9 = arith.cmpf oge, %7, %8 : vector<8x128xf32>
    %10 = arith.extui %9 : vector<8x128xi1> to vector<8x128xi32>
    %11 = arith.sitofp %10 : vector<8x128xi32> to vector<8x128xf32>
    %cst_10 = arith.constant 5.000000e-01 : f32
    %12 = vector.broadcast %cst_10 : f32 to vector<8x128xf32>
    %13 = arith.mulf %11, %12 : vector<8x128xf32>
    %14 = arith.subf %7, %13 : vector<8x128xf32>
    %15 = vector.broadcast %6 : vector<1x128xf32> to vector<8x128xf32>
    %16 = arith.mulf %11, %15 : vector<8x128xf32>
    %c0_11 = arith.constant 0 : index
    %c0_12 = arith.constant 0 : index
    %17 = vector.load %arg6[%c0_11, %c0_12] : memref<64x128xf32, #tpu.memory_space<vmem>>, vector<8x128xf32>
    tpu.vector_store %arg6[%c0_11, %c0_12], %16 {strides = array<i32>} : memref<64x128xf32, #tpu.memory_space<vmem>>, vector<8x128xf32>,
    %18 = arith.truncf %16 : vector<8x128xf32> to vector<8x128xbf16>
    %19 = vector.extract_strided_slice %4 {offsets = [8, 0], sizes = [8, 128], strides = [1, 1]} : vector<64x128xf32> to vector<8x128xf32>
    %cst_13 = arith.constant dense<0.000000e+00> : vector<8x128xf32>
    %20 = tpu.matmul %18, %5, %cst_13 {dimension_numbers = #tpu.dot_dimension_numbers<[1], [0], [0], [1], [0, 0, 1, 1], [], []>} : vector<8x128xbf16>, vector<128x128xbf16>, vector<8x128xf32> -> vector<8x128xf32>
    %21 = arith.addf %19, %20 : vector<8x128xf32>
    %cst_14 = arith.constant 0.899999976 : f32
    %22 = vector.broadcast %cst_14 : f32 to vector<8x128xf32>
    %23 = arith.mulf %22, %14 : vector<8x128xf32>
    %24 = arith.addf %23, %21 : vector<8x128xf32>
    %cst_15 = arith.constant 5.000000e-01 : f32
    %25 = vector.broadcast %cst_15 : f32 to vector<8x128xf32>
    %26 = arith.cmpf oge, %24, %25 : vector<8x128xf32>
    %27 = arith.extui %26 : vector<8x128xi1> to vector<8x128xi32>
    %28 = arith.sitofp %27 : vector<8x128xi32> to vector<8x128xf32>
    %cst_16 = arith.constant 5.000000e-01 : f32
    %29 = vector.broadcast %cst_16 : f32 to vector<8x128xf32>
    %30 = arith.mulf %28, %29 : vector<8x128xf32>
    %31 = arith.subf %24, %30 : vector<8x128xf32>
    %32 = vector.broadcast %6 : vector<1x128xf32> to vector<8x128xf32>
    %33 = arith.mulf %28, %32 : vector<8x128xf32>
    %c8 = arith.constant 8 : index
    %c0_17 = arith.constant 0 : index
    %34 = vector.load %arg6[%c8, %c0_17] : memref<64x128xf32, #tpu.memory_space<vmem>>, vector<8x128xf32>
    tpu.vector_store %arg6[%c8, %c0_17], %33 {strides = array<i32>} : memref<64x128xf32, #tpu.memory_space<vmem>>, vector<8x128xf32>,
    %35 = arith.truncf %33 : vector<8x128xf32> to vector<8x128xbf16>
    %36 = vector.extract_strided_slice %4 {offsets = [16, 0], sizes = [8, 128], strides = [1, 1]} : vector<64x128xf32> to vector<8x128xf32>
    %cst_18 = arith.constant dense<0.000000e+00> : vector<8x128xf32>
    %37 = tpu.matmul %35, %5, %cst_18 {dimension_numbers = #tpu.dot_dimension_numbers<[1], [0], [0], [1], [0, 0, 1, 1], [], []>} : vector<8x128xbf16>, vector<128x128xbf16>, vector<8x128xf32> -> vector<8x128xf32>
    %38 = arith.addf %36, %37 : vector<8x128xf32>
    %cst_19 = arith.constant 0.899999976 : f32
    %39 = vector.broadcast %cst_19 : f32 to vector<8x128xf32>
    %40 = arith.mulf %39, %31 : vector<8x128xf32>
    %41 = arith.addf %40, %38 : vector<8x128xf32>
    %cst_20 = arith.constant 5.000000e-01 : f32
    %42 = vector.broadcast %cst_20 : f32 to vector<8x128xf32>
    %43 = arith.cmpf oge, %41, %42 : vector<8x128xf32>
    %44 = arith.extui %43 : vector<8x128xi1> to vector<8x128xi32>
    %45 = arith.sitofp %44 : vector<8x128xi32> to vector<8x128xf32>
    %cst_21 = arith.constant 5.000000e-01 : f32
    %46 = vector.broadcast %cst_21 : f32 to vector<8x128xf32>
    %47 = arith.mulf %45, %46 : vector<8x128xf32>
    %48 = arith.subf %41, %47 : vector<8x128xf32>
    %49 = vector.broadcast %6 : vector<1x128xf32> to vector<8x128xf32>
    %50 = arith.mulf %45, %49 : vector<8x128xf32>
    %c16 = arith.constant 16 : index
    %c0_22 = arith.constant 0 : index
    %51 = vector.load %arg6[%c16, %c0_22] : memref<64x128xf32, #tpu.memory_space<vmem>>, vector<8x128xf32>
    tpu.vector_store %arg6[%c16, %c0_22], %50 {strides = array<i32>} : memref<64x128xf32, #tpu.memory_space<vmem>>, vector<8x128xf32>,
    %52 = arith.truncf %50 : vector<8x128xf32> to vector<8x128xbf16>
    %53 = vector.extract_strided_slice %4 {offsets = [24, 0], sizes = [8, 128], strides = [1, 1]} : vector<64x128xf32> to vector<8x128xf32>
    %cst_23 = arith.constant dense<0.000000e+00> : vector<8x128xf32>
    %54 = tpu.matmul %52, %5, %cst_23 {dimension_numbers = #tpu.dot_dimension_numbers<[1], [0], [0], [1], [0, 0, 1, 1], [], []>} : vector<8x128xbf16>, vector<128x128xbf16>, vector<8x128xf32> -> vector<8x128xf32>
    %55 = arith.addf %53, %54 : vector<8x128xf32>
    %cst_24 = arith.constant 0.899999976 : f32
    %56 = vector.broadcast %cst_24 : f32 to vector<8x128xf32>
    %57 = arith.mulf %56, %48 : vector<8x128xf32>
    %58 = arith.addf %57, %55 : vector<8x128xf32>
    %cst_25 = arith.constant 5.000000e-01 : f32
    %59 = vector.broadcast %cst_25 : f32 to vector<8x128xf32>
    %60 = arith.cmpf oge, %58, %59 : vector<8x128xf32>
    %61 = arith.extui %60 : vector<8x128xi1> to vector<8x128xi32>
    %62 = arith.sitofp %61 : vector<8x128xi32> to vector<8x128xf32>
    %cst_26 = arith.constant 5.000000e-01 : f32
    %63 = vector.broadcast %cst_26 : f32 to vector<8x128xf32>
    %64 = arith.mulf %62, %63 : vector<8x128xf32>
    %65 = arith.subf %58, %64 : vector<8x128xf32>
    %66 = vector.broadcast %6 : vector<1x128xf32> to vector<8x128xf32>
    %67 = arith.mulf %62, %66 : vector<8x128xf32>
    %c24 = arith.constant 24 : index
    %c0_27 = arith.constant 0 : index
    %68 = vector.load %arg6[%c24, %c0_27] : memref<64x128xf32, #tpu.memory_space<vmem>>, vector<8x128xf32>
    tpu.vector_store %arg6[%c24, %c0_27], %67 {strides = array<i32>} : memref<64x128xf32, #tpu.memory_space<vmem>>, vector<8x128xf32>,
    %69 = arith.truncf %67 : vector<8x128xf32> to vector<8x128xbf16>
    %70 = vector.extract_strided_slice %4 {offsets = [32, 0], sizes = [8, 128], strides = [1, 1]} : vector<64x128xf32> to vector<8x128xf32>
    %cst_28 = arith.constant dense<0.000000e+00> : vector<8x128xf32>
    %71 = tpu.matmul %69, %5, %cst_28 {dimension_numbers = #tpu.dot_dimension_numbers<[1], [0], [0], [1], [0, 0, 1, 1], [], []>} : vector<8x128xbf16>, vector<128x128xbf16>, vector<8x128xf32> -> vector<8x128xf32>
    %72 = arith.addf %70, %71 : vector<8x128xf32>
    %cst_29 = arith.constant 0.899999976 : f32
    %73 = vector.broadcast %cst_29 : f32 to vector<8x128xf32>
    %74 = arith.mulf %73, %65 : vector<8x128xf32>
    %75 = arith.addf %74, %72 : vector<8x128xf32>
    %cst_30 = arith.constant 5.000000e-01 : f32
    %76 = vector.broadcast %cst_30 : f32 to vector<8x128xf32>
    %77 = arith.cmpf oge, %75, %76 : vector<8x128xf32>
    %78 = arith.extui %77 : vector<8x128xi1> to vector<8x128xi32>
    %79 = arith.sitofp %78 : vector<8x128xi32> to vector<8x128xf32>
    %cst_31 = arith.constant 5.000000e-01 : f32
    %80 = vector.broadcast %cst_31 : f32 to vector<8x128xf32>
    %81 = arith.mulf %79, %80 : vector<8x128xf32>
    %82 = arith.subf %75, %81 : vector<8x128xf32>
    %83 = vector.broadcast %6 : vector<1x128xf32> to vector<8x128xf32>
    %84 = arith.mulf %79, %83 : vector<8x128xf32>
    %c32 = arith.constant 32 : index
    %c0_32 = arith.constant 0 : index
    %85 = vector.load %arg6[%c32, %c0_32] : memref<64x128xf32, #tpu.memory_space<vmem>>, vector<8x128xf32>
    tpu.vector_store %arg6[%c32, %c0_32], %84 {strides = array<i32>} : memref<64x128xf32, #tpu.memory_space<vmem>>, vector<8x128xf32>,
    %86 = arith.truncf %84 : vector<8x128xf32> to vector<8x128xbf16>
    %87 = vector.extract_strided_slice %4 {offsets = [40, 0], sizes = [8, 128], strides = [1, 1]} : vector<64x128xf32> to vector<8x128xf32>
    %cst_33 = arith.constant dense<0.000000e+00> : vector<8x128xf32>
    %88 = tpu.matmul %86, %5, %cst_33 {dimension_numbers = #tpu.dot_dimension_numbers<[1], [0], [0], [1], [0, 0, 1, 1], [], []>} : vector<8x128xbf16>, vector<128x128xbf16>, vector<8x128xf32> -> vector<8x128xf32>
    %89 = arith.addf %87, %88 : vector<8x128xf32>
    %cst_34 = arith.constant 0.899999976 : f32
    %90 = vector.broadcast %cst_34 : f32 to vector<8x128xf32>
    %91 = arith.mulf %90, %82 : vector<8x128xf32>
    %92 = arith.addf %91, %89 : vector<8x128xf32>
    %cst_35 = arith.constant 5.000000e-01 : f32
    %93 = vector.broadcast %cst_35 : f32 to vector<8x128xf32>
    %94 = arith.cmpf oge, %92, %93 : vector<8x128xf32>
    %95 = arith.extui %94 : vector<8x128xi1> to vector<8x128xi32>
    %96 = arith.sitofp %95 : vector<8x128xi32> to vector<8x128xf32>
    %cst_36 = arith.constant 5.000000e-01 : f32
    %97 = vector.broadcast %cst_36 : f32 to vector<8x128xf32>
    %98 = arith.mulf %96, %97 : vector<8x128xf32>
    %99 = arith.subf %92, %98 : vector<8x128xf32>
    %100 = vector.broadcast %6 : vector<1x128xf32> to vector<8x128xf32>
    %101 = arith.mulf %96, %100 : vector<8x128xf32>
    %c40 = arith.constant 40 : index
    %c0_37 = arith.constant 0 : index
    %102 = vector.load %arg6[%c40, %c0_37] : memref<64x128xf32, #tpu.memory_space<vmem>>, vector<8x128xf32>
    tpu.vector_store %arg6[%c40, %c0_37], %101 {strides = array<i32>} : memref<64x128xf32, #tpu.memory_space<vmem>>, vector<8x128xf32>,
    %103 = arith.truncf %101 : vector<8x128xf32> to vector<8x128xbf16>
    %104 = vector.extract_strided_slice %4 {offsets = [48, 0], sizes = [8, 128], strides = [1, 1]} : vector<64x128xf32> to vector<8x128xf32>
    %cst_38 = arith.constant dense<0.000000e+00> : vector<8x128xf32>
    %105 = tpu.matmul %103, %5, %cst_38 {dimension_numbers = #tpu.dot_dimension_numbers<[1], [0], [0], [1], [0, 0, 1, 1], [], []>} : vector<8x128xbf16>, vector<128x128xbf16>, vector<8x128xf32> -> vector<8x128xf32>
    %106 = arith.addf %104, %105 : vector<8x128xf32>
    %cst_39 = arith.constant 0.899999976 : f32
    %107 = vector.broadcast %cst_39 : f32 to vector<8x128xf32>
    %108 = arith.mulf %107, %99 : vector<8x128xf32>
    %109 = arith.addf %108, %106 : vector<8x128xf32>
    %cst_40 = arith.constant 5.000000e-01 : f32
    %110 = vector.broadcast %cst_40 : f32 to vector<8x128xf32>
    %111 = arith.cmpf oge, %109, %110 : vector<8x128xf32>
    %112 = arith.extui %111 : vector<8x128xi1> to vector<8x128xi32>
    %113 = arith.sitofp %112 : vector<8x128xi32> to vector<8x128xf32>
    %cst_41 = arith.constant 5.000000e-01 : f32
    %114 = vector.broadcast %cst_41 : f32 to vector<8x128xf32>
    %115 = arith.mulf %113, %114 : vector<8x128xf32>
    %116 = arith.subf %109, %115 : vector<8x128xf32>
    %117 = vector.broadcast %6 : vector<1x128xf32> to vector<8x128xf32>
    %118 = arith.mulf %113, %117 : vector<8x128xf32>
    %c48 = arith.constant 48 : index
    %c0_42 = arith.constant 0 : index
    %119 = vector.load %arg6[%c48, %c0_42] : memref<64x128xf32, #tpu.memory_space<vmem>>, vector<8x128xf32>
    tpu.vector_store %arg6[%c48, %c0_42], %118 {strides = array<i32>} : memref<64x128xf32, #tpu.memory_space<vmem>>, vector<8x128xf32>,
    %120 = arith.truncf %118 : vector<8x128xf32> to vector<8x128xbf16>
    %121 = vector.extract_strided_slice %4 {offsets = [56, 0], sizes = [8, 128], strides = [1, 1]} : vector<64x128xf32> to vector<8x128xf32>
    %cst_43 = arith.constant dense<0.000000e+00> : vector<8x128xf32>
    %122 = tpu.matmul %120, %5, %cst_43 {dimension_numbers = #tpu.dot_dimension_numbers<[1], [0], [0], [1], [0, 0, 1, 1], [], []>} : vector<8x128xbf16>, vector<128x128xbf16>, vector<8x128xf32> -> vector<8x128xf32>
    %123 = arith.addf %121, %122 : vector<8x128xf32>
    %cst_44 = arith.constant 0.899999976 : f32
    %124 = vector.broadcast %cst_44 : f32 to vector<8x128xf32>
    %125 = arith.mulf %124, %116 : vector<8x128xf32>
    %126 = arith.addf %125, %123 : vector<8x128xf32>
    %cst_45 = arith.constant 5.000000e-01 : f32
    %127 = vector.broadcast %cst_45 : f32 to vector<8x128xf32>
    %128 = arith.cmpf oge, %126, %127 : vector<8x128xf32>
    %129 = arith.extui %128 : vector<8x128xi1> to vector<8x128xi32>
    %130 = arith.sitofp %129 : vector<8x128xi32> to vector<8x128xf32>
    %cst_46 = arith.constant 5.000000e-01 : f32
    %131 = vector.broadcast %cst_46 : f32 to vector<8x128xf32>
    %132 = arith.mulf %130, %131 : vector<8x128xf32>
    %133 = arith.subf %126, %132 : vector<8x128xf32>
    %134 = vector.broadcast %6 : vector<1x128xf32> to vector<8x128xf32>
    %135 = arith.mulf %130, %134 : vector<8x128xf32>
    %c56 = arith.constant 56 : index
    %c0_47 = arith.constant 0 : index
    %136 = vector.load %arg6[%c56, %c0_47] : memref<64x128xf32, #tpu.memory_space<vmem>>, vector<8x128xf32>
    tpu.vector_store %arg6[%c56, %c0_47], %135 {strides = array<i32>} : memref<64x128xf32, #tpu.memory_space<vmem>>, vector<8x128xf32>,
    %c0_48 = arith.constant 0 : index
    %c0_49 = arith.constant 0 : index
    %137 = vector.load %arg7[%c0_48, %c0_49] : memref<8x128xf32, #tpu.memory_space<vmem>>, vector<8x128xf32>
    tpu.vector_store %arg7[%c0_48, %c0_49], %133 {strides = array<i32>} : memref<8x128xf32, #tpu.memory_space<vmem>>, vector<8x128xf32>,
    return
  }
  func.func @transform_0(%arg0: i32) -> (i32, i32) {
    %c0_i32 = arith.constant 0 : i32
    %c0_i32_0 = arith.constant 0 : i32
    %c0_i32_1 = arith.constant 0 : i32
    return %c0_i32, %c0_i32_0 : i32, i32
  }
  func.func @transform_1(%arg0: i32) -> (i32, i32) {
    %c0_i32 = arith.constant 0 : i32
    %c0_i32_0 = arith.constant 0 : i32
    %c0_i32_1 = arith.constant 0 : i32
    return %c0_i32, %c0_i32_0 : i32, i32
  }
  func.func @transform_2(%arg0: i32) -> (i32, i32) {
    %c0_i32 = arith.constant 0 : i32
    %c0_i32_0 = arith.constant 0 : i32
    %c0_i32_1 = arith.constant 0 : i32
    return %c0_i32, %c0_i32_0 : i32, i32
  }
  func.func @transform_3(%arg0: i32) -> (i32, i32) {
    %c0_i32 = arith.constant 0 : i32
    %c0_i32_0 = arith.constant 0 : i32
    %c0_i32_1 = arith.constant 0 : i32
    return %c0_i32, %c0_i32_0 : i32, i32
  }
  func.func @transform_4(%arg0: i32) -> (i32, i32) {
    %c0_i32 = arith.constant 0 : i32
    %c0_i32_0 = arith.constant 0 : i32
    %c0_i32_1 = arith.constant 0 : i32
    return %c0_i32, %c0_i32_0 : i32, i32
  }
  func.func @transform_5(%arg0: i32) -> (i32, i32) {
    %c0_i32 = arith.constant 0 : i32
    %c0_i32_0 = arith.constant 0 : i32
    %c0_i32_1 = arith.constant 0 : i32
    return %c0_i32, %c0_i32_0 : i32, i32
  }
  func.func @transform_6(%arg0: i32) -> (i32, i32) {
    %c0_i32 = arith.constant 0 : i32
    %c0_i32_0 = arith.constant 0 : i32
    %c0_i32_1 = arith.constant 0 : i32
    return %c0_i32, %c0_i32_0 : i32, i32
  }
}

</mosaic_0001>

<llo_original>
// kernel: tpu_custom_call.1
$region0: #{tpu_custom_call.1}
  #allocation0 [shape = 'u32[]', space=smem, size = 0x4, offset = 0x4, fixed_abs, tag = 'smem constant byte address 0x4 - core index']
  #allocation1 [shape = 'u32[144,128]{1,0:T(1,128)}', space=vmem, size = 0x12000, scoped, tag = 'internal scratch']
  %s0 = inlined_call_operand.hbm [shape: bf16[64,128], index: 0, kind: input, shape index: {}]
  %s1 = inlined_call_operand.hbm [shape: bf16[128,128], index: 1, kind: input, shape index: {}]
  %s2 = inlined_call_operand.hbm [shape: f32[64,128], index: 2, kind: input, shape index: {}]
  %s3 = inlined_call_operand.hbm [shape: bf16[128,128], index: 3, kind: input, shape index: {}]
  %s4 = inlined_call_operand.vmem [shape: f32[1,128], index: 4, kind: input, shape index: {}]
  %s5 = inlined_call_operand.hbm [shape: f32[64,128], index: 5, kind: output, shape index: {0}]
  %s6 = inlined_call_operand.hbm [shape: f32[8,128], index: 6, kind: output, shape index: {1}]
  %7 = xla_tuple %s5, %s6
  %s8 = sld [smem:[#allocation0]]
  $region54: #{tpu_custom_call.1} parent=0
    _
  %s10 = ssub.s32 1, %s8
  %s11 = scalar_select 0, %s10, %s8
  $region1: #{tpu_custom_call.1} parent=0
    #allocation2 [shape = 'u8[16384]{0}', space=vmem, size = 0x4000, scoped, tag = 'input window, operand 0, single buffered']
    #allocation3 [shape = 's32[1]{0}', space=sflag, size = 0x4, scoped, tag = 'scoped memory for tpu_custom_call.1']
    #allocation4 [shape = 's32[1]{0}', space=sflag, size = 0x4, scoped, tag = 'scoped memory for tpu_custom_call.1']
    #allocation5 [shape = 'u8[32768]{0}', space=vmem, size = 0x8000, scoped, tag = 'input window, operand 1, single buffered']
    #allocation6 [shape = 's32[1]{0}', space=sflag, size = 0x4, scoped, tag = 'scoped memory for tpu_custom_call.1']
    #allocation7 [shape = 'u8[32768]{0}', space=vmem, size = 0x8000, scoped, tag = 'input window, operand 2, single buffered']
    #allocation8 [shape = 'u8[32768]{0}', space=vmem, size = 0x8000, scoped, tag = 'input window, operand 3, single buffered']
    #allocation9 [shape = 's32[1]{0}', space=sflag, size = 0x4, scoped, tag = 'scoped memory for tpu_custom_call.1']
    #allocation10 [shape = 'u8[32768]{0}', space=vmem, size = 0x8000, scoped, tag = 'output window, operand 0, single buffered']
    #allocation11 [shape = 'u8[4096]{0}', space=vmem, size = 0x1000, scoped, tag = 'output window, operand 1, single buffered']
    #allocation12 [shape = 's32[1]{0}', space=sflag, size = 0x4, scoped, tag = 'scoped memory for tpu_custom_call.1']
    %12 = vsyncpa [#allocation3], 0
    %13 = vsyncpa [#allocation6], 0
    %14 = vsyncpa [#allocation9], 0
    %15 = vsyncpa [#allocation4], 0
    %16 = vsyncpa [#allocation12], 0
    // Predicated region
    $region2: #{tpu_custom_call.1} parent=1 // pred_check
      _
    $region3: #{tpu_custom_call.1} parent=1 // pred_check_branch
      %18 = sbr.rel (0) target = $region5
    $region4: #{tpu_custom_call.1} parent=1 // pred_region
      %s20 = ssub.s32 512, 512
      %21 = vsyncadd [#allocation3], %s20
      %s22 = sshll.u32 [#allocation2], 4
      %s23 = int_to_ptr.vmem [resolvable:$true] %s22
      %28 = dma.hbm_to_vmem [thread:$0]  %s0, 512, %s23, [#allocation3], 64, 64, 4
    $region5: #{tpu_custom_call.1} parent=1 // pred_fallthru
      _
    // Predicated region
    $region6: #{tpu_custom_call.1} parent=1 // pred_check
      _
    $region7: #{tpu_custom_call.1} parent=1 // pred_check_branch
      %30 = sbr.rel (0) target = $region9
    $region8: #{tpu_custom_call.1} parent=1 // pred_region
      %s32 = ssub.s32 1024, 1024
      %33 = vsyncadd [#allocation6], %s32
      %s34 = sshll.u32 [#allocation5], 4
      %s35 = int_to_ptr.vmem [resolvable:$true] %s34
      %40 = dma.hbm_to_vmem [thread:$0]  %s1, 1024, %s35, [#allocation6], 64, 64, 4
    $region9: #{tpu_custom_call.1} parent=1 // pred_fallthru
      _
    // Predicated region
    $region10: #{tpu_custom_call.1} parent=1 // pred_check
      _
    $region11: #{tpu_custom_call.1} parent=1 // pred_check_branch
      %42 = sbr.rel (0) target = $region13
    $region12: #{tpu_custom_call.1} parent=1 // pred_region
      %s44 = ssub.s32 1024, 1024
      %45 = vsyncadd [#allocation6], %s44
      %s46 = sshll.u32 [#allocation7], 4
      %s47 = int_to_ptr.vmem [resolvable:$true] %s46
      %52 = dma.hbm_to_vmem [thread:$0]  %s2, 1024, %s47, [#allocation6], 128, 128, 8
    $region13: #{tpu_custom_call.1} parent=1 // pred_fallthru
      _
    // Predicated region
    $region14: #{tpu_custom_call.1} parent=1 // pred_check
      _
    $region15: #{tpu_custom_call.1} parent=1 // pred_check_branch
      %54 = sbr.rel (0) target = $region17
    $region16: #{tpu_custom_call.1} parent=1 // pred_region
      %s56 = ssub.s32 1024, 1024
      %57 = vsyncadd [#allocation9], %s56
      %s58 = sshll.u32 [#allocation8], 4
      %s59 = int_to_ptr.vmem [resolvable:$true] %s58
      %64 = dma.hbm_to_vmem [thread:$0]  %s3, 1024, %s59, [#allocation9], 64, 64, 4
    $region17: #{tpu_custom_call.1} parent=1 // pred_fallthru
      _
    // Predicated region
    $region18: #{tpu_custom_call.1} parent=1 // pred_check
      _
    $region19: #{tpu_custom_call.1} parent=1 // pred_check_branch
      %66 = sbr.rel (0) target = $region21
    $region20: #{tpu_custom_call.1} parent=1 // pred_region
      _
    $region21: #{tpu_custom_call.1} parent=1 // pred_fallthru
      _
    // Predicated region
    $region22: #{tpu_custom_call.1} parent=1 // pred_check
      _
    $region23: #{tpu_custom_call.1} parent=1 // pred_check_branch
      %68 = sbr.rel (0) target = $region25
    $region24: #{tpu_custom_call.1} parent=1 // pred_region
      %69 = dma.done [#allocation3], 512
    $region25: #{tpu_custom_call.1} parent=1 // pred_fallthru
      _
    // Predicated region
    $region26: #{tpu_custom_call.1} parent=1 // pred_check
      _
    $region27: #{tpu_custom_call.1} parent=1 // pred_check_branch
      %71 = sbr.rel (0) target = $region29
    $region28: #{tpu_custom_call.1} parent=1 // pred_region
      %72 = dma.done [#allocation6], 1024
    $region29: #{tpu_custom_call.1} parent=1 // pred_fallthru
      _
    // Predicated region
    $region30: #{tpu_custom_call.1} parent=1 // pred_check
      _
    $region31: #{tpu_custom_call.1} parent=1 // pred_check_branch
      %74 = sbr.rel (0) target = $region33
    $region32: #{tpu_custom_call.1} parent=1 // pred_region
      %75 = dma.done [#allocation6], 1024
    $region33: #{tpu_custom_call.1} parent=1 // pred_fallthru
      _
    // Predicated region
    $region34: #{tpu_custom_call.1} parent=1 // pred_check
      _
    $region35: #{tpu_custom_call.1} parent=1 // pred_check_branch
      %77 = sbr.rel (0) target = $region37
    $region36: #{tpu_custom_call.1} parent=1 // pred_region
      %78 = dma.done [#allocation9], 1024
    $region37: #{tpu_custom_call.1} parent=1 // pred_fallthru
      _
    %v80 = vld [vmem:[#allocation2] sm:$0xf]
    %v81 = vld [vmem:[#allocation2 + $0x4] sm:$0xf]
    %v82 = vld [vmem:[#allocation2 + $0x8] sm:$0xf]
    %v83 = vld [vmem:[#allocation2 + $0xc] sm:$0xf]
    %v84 = vld [vmem:[#allocation2 + $0x10] sm:$0xf]
    %v85 = vld [vmem:[#allocation2 + $0x14] sm:$0xf]
    %v86 = vld [vmem:[#allocation2 + $0x18] sm:$0xf]
    %v87 = vld [vmem:[#allocation2 + $0x1c] sm:$0xf]
    %v88 = vld [vmem:[#allocation5] sm:$0xf]
    %v89 = vld [vmem:[#allocation5 + $0x4] sm:$0xf]
    %v90 = vld [vmem:[#allocation5 + $0x8] sm:$0xf]
    %v91 = vld [vmem:[#allocation5 + $0xc] sm:$0xf]
    %v92 = vld [vmem:[#allocation5 + $0x10] sm:$0xf]
    %v93 = vld [vmem:[#allocation5 + $0x14] sm:$0xf]
    %v94 = vld [vmem:[#allocation5 + $0x18] sm:$0xf]
    %v95 = vld [vmem:[#allocation5 + $0x1c] sm:$0xf]
    %v96 = vld [vmem:[#allocation5 + $0x20] sm:$0xf]
    %v97 = vld [vmem:[#allocation5 + $0x24] sm:$0xf]
    %v98 = vld [vmem:[#allocation5 + $0x28] sm:$0xf]
    %v99 = vld [vmem:[#allocation5 + $0x2c] sm:$0xf]
    %v100 = vld [vmem:[#allocation5 + $0x30] sm:$0xf]
    %v101 = vld [vmem:[#allocation5 + $0x34] sm:$0xf]
    %v102 = vld [vmem:[#allocation5 + $0x38] sm:$0xf]
    %v103 = vld [vmem:[#allocation5 + $0x3c] sm:$0xf]
    %v104 = vld [vmem:[#allocation7] sm:$0xff]
    %v105 = vld [vmem:[#allocation7 + $0x8] sm:$0xff]
    %v106 = vld [vmem:[#allocation7 + $0x10] sm:$0xff]
    %v107 = vld [vmem:[#allocation7 + $0x18] sm:$0xff]
    %v108 = vld [vmem:[#allocation7 + $0x20] sm:$0xff]
    %v109 = vld [vmem:[#allocation7 + $0x28] sm:$0xff]
    %v110 = vld [vmem:[#allocation7 + $0x30] sm:$0xff]
    %v111 = vld [vmem:[#allocation7 + $0x38] sm:$0xff]
    %v120 = vunpack.c.l.b16 %v80
    %v121 = vunpack.c.l.b16 %v81
    %v122 = vunpack.c.l.b16 %v82
    %v123 = vunpack.c.l.b16 %v83
    %v124 = vunpack.c.l.b16 %v84
    %v125 = vunpack.c.l.b16 %v85
    %v126 = vunpack.c.l.b16 %v86
    %v127 = vunpack.c.l.b16 %v87
    %v128 = vpack.c.b16 %v121, %v120
    %v129 = vpack.c.b16 %v123, %v122
    %v130 = vpack.c.b16 %v125, %v124
    %v131 = vpack.c.b16 %v127, %v126
    %v152 = vunpack.c.l.b16 %v88
    %v153 = vunpack.c.l.b16 %v89
    %v154 = vunpack.c.l.b16 %v90
    %v155 = vunpack.c.l.b16 %v91
    %v156 = vunpack.c.l.b16 %v92
    %v157 = vunpack.c.l.b16 %v93
    %v158 = vunpack.c.l.b16 %v94
    %v159 = vunpack.c.l.b16 %v95
    %v160 = vunpack.c.l.b16 %v96
    %v161 = vunpack.c.l.b16 %v97
    %v162 = vunpack.c.l.b16 %v98
    %v163 = vunpack.c.l.b16 %v99
    %v164 = vunpack.c.l.b16 %v100
    %v165 = vunpack.c.l.b16 %v101
    %v166 = vunpack.c.l.b16 %v102
    %v167 = vunpack.c.l.b16 %v103
    %v168 = vpack.c.b16 %v153, %v152
    %v169 = vpack.c.b16 %v155, %v154
    %v170 = vpack.c.b16 %v157, %v156
    %v171 = vpack.c.b16 %v159, %v158
    %v172 = vpack.c.b16 %v161, %v160
    %v173 = vpack.c.b16 %v163, %v162
    %v174 = vpack.c.b16 %v165, %v164
    %v175 = vpack.c.b16 %v167, %v166
    %184 = vmatprep.subr.bf16.mxu0 0
    %185 = vmatpush1.bf16.msra.mxu0 %v175
    %186 = vmatprep.subr.bf16.mxu0 0
    %187 = vmatpush1.bf16.msra.mxu0 %v174
    %188 = vmatprep.subr.bf16.mxu0 0
    %189 = vmatpush1.bf16.msra.mxu0 %v173
    %190 = vmatprep.subr.bf16.mxu0 0
    %191 = vmatpush1.bf16.msra.mxu0 %v172
    %192 = vmatprep.subr.bf16.mxu0 0
    %193 = vmatpush1.bf16.msra.mxu0 %v171
    %194 = vmatprep.subr.bf16.mxu0 0
    %195 = vmatpush1.bf16.msra.mxu0 %v170
    %196 = vmatprep.subr.bf16.mxu0 0
    %197 = vmatpush1.bf16.msra.mxu0 %v169
    %198 = vmatprep.subr.bf16.mxu0 0
    %199 = vmatpush1.bf16.msra.mxu0 %v168
    %200 = vmatprep.subr.bf16.mxu0 0
    %201 = vmatpush2.bf16.msra.mxu0 0
    %202 = vmatprep.subr.bf16.mxu0 0
    %203 = vmatpush2.bf16.msra.mxu0 0
    %204 = vmatprep.subr.bf16.mxu0 0
    %205 = vmatpush2.bf16.msra.mxu0 0
    %206 = vmatprep.subr.bf16.mxu0 0
    %207 = vmatpush2.bf16.msra.mxu0 0
    %208 = vmatprep.subr.bf16.mxu0 0
    %209 = vmatpush2.bf16.msra.mxu0 0
    %210 = vmatprep.subr.bf16.mxu0 0
    %211 = vmatpush2.bf16.msra.mxu0 0
    %212 = vmatprep.subr.bf16.mxu0 0
    %213 = vmatpush2.bf16.msra.mxu0 0
    %214 = vmatprep.subr.bf16.mxu0 0
    %215 = vmatpush2.bf16.msra.mxu0 0
    %216 = vmatprep.mubr.bf16.mxu0 0
    %217 = vmatmul.mubr.bf16.gmra.mxu0 %v128
    %v218 = vpop.f32.mrf.mxu0
    %v219 = vadd.f32 %v104, %v218
    %v220 = vpop.f32.mrf.mxu0
    %v221 = vpop.f32.mrf.mxu0
    %v222 = vadd.f32 %v105, %v221
    %v223 = vpop.f32.mrf.mxu0
    %224 = vmatprep.mubr.bf16.mxu0 0
    %225 = vmatmul.mubr.bf16.gmra.mxu0 %v129
    %v226 = vpop.f32.mrf.mxu0
    %v227 = vadd.f32 %v106, %v226
    %v228 = vpop.f32.mrf.mxu0
    %v229 = vpop.f32.mrf.mxu0
    %v230 = vadd.f32 %v107, %v229
    %v231 = vpop.f32.mrf.mxu0
    %232 = vmatprep.mubr.bf16.mxu0 0
    %233 = vmatmul.mubr.bf16.gmra.mxu0 %v130
    %v234 = vpop.f32.mrf.mxu0
    %v235 = vadd.f32 %v108, %v234
    %v236 = vpop.f32.mrf.mxu0
    %v237 = vpop.f32.mrf.mxu0
    %v238 = vadd.f32 %v109, %v237
    %v239 = vpop.f32.mrf.mxu0
    %240 = vmatprep.mubr.bf16.mxu0 0
    %241 = vmatmul.mubr.bf16.gmra.mxu0 %v131
    %v242 = vpop.f32.mrf.mxu0
    %v243 = vadd.f32 %v110, %v242
    %v244 = vpop.f32.mrf.mxu0
    %v245 = vpop.f32.mrf.mxu0
    %v246 = vadd.f32 %v111, %v245
    %v247 = vpop.f32.mrf.mxu0
    %248 = vdwg.mxu0
    %v249 = vld [vmem:[#allocation8] sm:$0xf]
    %v250 = vld [vmem:[#allocation8 + $0x4] sm:$0xf]
    %v251 = vld [vmem:[#allocation8 + $0x8] sm:$0xf]
    %v252 = vld [vmem:[#allocation8 + $0xc] sm:$0xf]
    %v253 = vld [vmem:[#allocation8 + $0x10] sm:$0xf]
    %v254 = vld [vmem:[#allocation8 + $0x14] sm:$0xf]
    %v255 = vld [vmem:[#allocation8 + $0x18] sm:$0xf]
    %v256 = vld [vmem:[#allocation8 + $0x1c] sm:$0xf]
    %v257 = vld [vmem:[#allocation8 + $0x20] sm:$0xf]
    %v258 = vld [vmem:[#allocation8 + $0x24] sm:$0xf]
    %v259 = vld [vmem:[#allocation8 + $0x28] sm:$0xf]
    %v260 = vld [vmem:[#allocation8 + $0x2c] sm:$0xf]
    %v261 = vld [vmem:[#allocation8 + $0x30] sm:$0xf]
    %v262 = vld [vmem:[#allocation8 + $0x34] sm:$0xf]
    %v263 = vld [vmem:[#allocation8 + $0x38] sm:$0xf]
    %v264 = vld [vmem:[#allocation8 + $0x3c] sm:$0xf]
    %v265 = vld [vmem:[%s4] sm:$0x1]
    %vm266 = vcmp.ge.f32.partialorder %v219, 0.5
    %v267 = vsel %vm266, 1, 0
    %v268 = vcvt.s32.f32 %v267
    %v269 = vmul.f32 %v268, 0.5
    %v270 = vsub.f32 %v219, %v269
    %v272 = vlaneseq
    %v273 = vshrl.u32 %v272, 7
    %v274 = vsub.s32 0, %v273
    %v275 = vrot.slane %v265, %v274
    %v277 = vmul.f32 %v268, %v275
    %278 = vst [vmem:[#allocation10] sm:$0xff] %v277
    %v279 = vpack.c.bf16 %v277, %v277
    %v296 = vunpack.c.l.b16 %v249
    %v297 = vunpack.c.l.b16 %v250
    %v298 = vunpack.c.l.b16 %v251
    %v299 = vunpack.c.l.b16 %v252
    %v300 = vunpack.c.l.b16 %v253
    %v301 = vunpack.c.l.b16 %v254
    %v302 = vunpack.c.l.b16 %v255
    %v303 = vunpack.c.l.b16 %v256
    %v304 = vunpack.c.l.b16 %v257
    %v305 = vunpack.c.l.b16 %v258
    %v306 = vunpack.c.l.b16 %v259
    %v307 = vunpack.c.l.b16 %v260
    %v308 = vunpack.c.l.b16 %v261
    %v309 = vunpack.c.l.b16 %v262
    %v310 = vunpack.c.l.b16 %v263
    %v311 = vunpack.c.l.b16 %v264
    %v312 = vpack.c.b16 %v297, %v296
    %v313 = vpack.c.b16 %v299, %v298
    %v314 = vpack.c.b16 %v301, %v300
    %v315 = vpack.c.b16 %v303, %v302
    %v316 = vpack.c.b16 %v305, %v304
    %v317 = vpack.c.b16 %v307, %v306
    %v318 = vpack.c.b16 %v309, %v308
    %v319 = vpack.c.b16 %v311, %v310
    %328 = vmatprep.subr.bf16.mxu0 0
    %329 = vmatpush1.bf16.msra.mxu0 %v319
    %330 = vmatprep.subr.bf16.mxu0 0
    %331 = vmatpush1.bf16.msra.mxu0 %v318
    %332 = vmatprep.subr.bf16.mxu0 0
    %333 = vmatpush1.bf16.msra.mxu0 %v317
    %334 = vmatprep.subr.bf16.mxu0 0
    %335 = vmatpush1.bf16.msra.mxu0 %v316
    %336 = vmatprep.subr.bf16.mxu0 0
    %337 = vmatpush1.bf16.msra.mxu0 %v315
    %338 = vmatprep.subr.bf16.mxu0 0
    %339 = vmatpush1.bf16.msra.mxu0 %v314
    %340 = vmatprep.subr.bf16.mxu0 0
    %341 = vmatpush1.bf16.msra.mxu0 %v313
    %342 = vmatprep.subr.bf16.mxu0 0
    %343 = vmatpush1.bf16.msra.mxu0 %v312
    %344 = vmatprep.subr.bf16.mxu0 0
    %345 = vmatpush2.bf16.msra.mxu0 0
    %346 = vmatprep.subr.bf16.mxu0 0
    %347 = vmatpush2.bf16.msra.mxu0 0
    %348 = vmatprep.subr.bf16.mxu0 0
    %349 = vmatpush2.bf16.msra.mxu0 0
    %350 = vmatprep.subr.bf16.mxu0 0
    %351 = vmatpush2.bf16.msra.mxu0 0
    %352 = vmatprep.subr.bf16.mxu0 0
    %353 = vmatpush2.bf16.msra.mxu0 0
    %354 = vmatprep.subr.bf16.mxu0 0
    %355 = vmatpush2.bf16.msra.mxu0 0
    %356 = vmatprep.subr.bf16.mxu0 0
    %357 = vmatpush2.bf16.msra.mxu0 0
    %358 = vmatprep.subr.bf16.mxu0 0
    %359 = vmatpush2.bf16.msra.mxu0 0
    %360 = vmatprep.mubr.bf16.mxu0 0
    %361 = vmatmul.mubr.bf16.gmra.mxu0 %v279
    %v362 = vpop.f32.mrf.mxu0
    %v363 = vadd.f32 0.0, %v362
    %v364 = vpop.f32.mrf.mxu0
    %v365 = vpop.f32.mrf.mxu0
    %v366 = vpop.f32.mrf.mxu0
    %367 = vdwg.mxu0
    %v368 = vadd.f32 %v222, %v363
    %v369 = vmul.f32 %v270, 0.9
    %v370 = vadd.f32 %v369, %v368
    %vm371 = vcmp.ge.f32.partialorder %v370, 0.5
    %v372 = vsel %vm371, 1, 0
    %v373 = vcvt.s32.f32 %v372
    %v374 = vmul.f32 %v373, 0.5
    %v375 = vsub.f32 %v370, %v374
    %v376 = vmul.f32 %v373, %v275
    %377 = vst [vmem:[#allocation10 + $0x8] sm:$0xff] %v376
    %v378 = vpack.c.bf16 %v376, %v376
    %379 = vmatprep.subr.bf16.mxu0 0
    %380 = vmatpush1.bf16.msra.mxu0 %v319
    %381 = vmatprep.subr.bf16.mxu0 0
    %382 = vmatpush1.bf16.msra.mxu0 %v318
    %383 = vmatprep.subr.bf16.mxu0 0
    %384 = vmatpush1.bf16.msra.mxu0 %v317
    %385 = vmatprep.subr.bf16.mxu0 0
    %386 = vmatpush1.bf16.msra.mxu0 %v316
    %387 = vmatprep.subr.bf16.mxu0 0
    %388 = vmatpush1.bf16.msra.mxu0 %v315
    %389 = vmatprep.subr.bf16.mxu0 0
    %390 = vmatpush1.bf16.msra.mxu0 %v314
    %391 = vmatprep.subr.bf16.mxu0 0
    %392 = vmatpush1.bf16.msra.mxu0 %v313
    %393 = vmatprep.subr.bf16.mxu0 0
    %394 = vmatpush1.bf16.msra.mxu0 %v312
    %395 = vmatprep.subr.bf16.mxu0 0
    %396 = vmatpush2.bf16.msra.mxu0 0
    %397 = vmatprep.subr.bf16.mxu0 0
    %398 = vmatpush2.bf16.msra.mxu0 0
    %399 = vmatprep.subr.bf16.mxu0 0
    %400 = vmatpush2.bf16.msra.mxu0 0
    %401 = vmatprep.subr.bf16.mxu0 0
    %402 = vmatpush2.bf16.msra.mxu0 0
    %403 = vmatprep.subr.bf16.mxu0 0
    %404 = vmatpush2.bf16.msra.mxu0 0
    %405 = vmatprep.subr.bf16.mxu0 0
    %406 = vmatpush2.bf16.msra.mxu0 0
    %407 = vmatprep.subr.bf16.mxu0 0
    %408 = vmatpush2.bf16.msra.mxu0 0
    %409 = vmatprep.subr.bf16.mxu0 0
    %410 = vmatpush2.bf16.msra.mxu0 0
    %411 = vmatprep.mubr.bf16.mxu0 0
    %412 = vmatmul.mubr.bf16.gmra.mxu0 %v378
    %v413 = vpop.f32.mrf.mxu0
    %v414 = vadd.f32 0.0, %v413
    %v415 = vpop.f32.mrf.mxu0
    %v416 = vpop.f32.mrf.mxu0
    %v417 = vpop.f32.mrf.mxu0
    %418 = vdwg.mxu0
    %v419 = vadd.f32 %v227, %v414
    %v420 = vmul.f32 %v375, 0.9
    %v421 = vadd.f32 %v420, %v419
    %vm422 = vcmp.ge.f32.partialorder %v421, 0.5
    %v423 = vsel %vm422, 1, 0
    %v424 = vcvt.s32.f32 %v423
    %v425 = vmul.f32 %v424, 0.5
    %v426 = vsub.f32 %v421, %v425
    %v427 = vmul.f32 %v424, %v275
    %428 = vst [vmem:[#allocation10 + $0x10] sm:$0xff] %v427
    %v429 = vpack.c.bf16 %v427, %v427
    %430 = vmatprep.subr.bf16.mxu0 0
    %431 = vmatpush1.bf16.msra.mxu0 %v319
    %432 = vmatprep.subr.bf16.mxu0 0
    %433 = vmatpush1.bf16.msra.mxu0 %v318
    %434 = vmatprep.subr.bf16.mxu0 0
    %435 = vmatpush1.bf16.msra.mxu0 %v317
    %436 = vmatprep.subr.bf16.mxu0 0
    %437 = vmatpush1.bf16.msra.mxu0 %v316
    %438 = vmatprep.subr.bf16.mxu0 0
    %439 = vmatpush1.bf16.msra.mxu0 %v315
    %440 = vmatprep.subr.bf16.mxu0 0
    %441 = vmatpush1.bf16.msra.mxu0 %v314
    %442 = vmatprep.subr.bf16.mxu0 0
    %443 = vmatpush1.bf16.msra.mxu0 %v313
    %444 = vmatprep.subr.bf16.mxu0 0
    %445 = vmatpush1.bf16.msra.mxu0 %v312
    %446 = vmatprep.subr.bf16.mxu0 0
    %447 = vmatpush2.bf16.msra.mxu0 0
    %448 = vmatprep.subr.bf16.mxu0 0
    %449 = vmatpush2.bf16.msra.mxu0 0
    %450 = vmatprep.subr.bf16.mxu0 0
    %451 = vmatpush2.bf16.msra.mxu0 0
    %452 = vmatprep.subr.bf16.mxu0 0
    %453 = vmatpush2.bf16.msra.mxu0 0
    %454 = vmatprep.subr.bf16.mxu0 0
    %455 = vmatpush2.bf16.msra.mxu0 0
    %456 = vmatprep.subr.bf16.mxu0 0
    %457 = vmatpush2.bf16.msra.mxu0 0
    %458 = vmatprep.subr.bf16.mxu0 0
    %459 = vmatpush2.bf16.msra.mxu0 0
    %460 = vmatprep.subr.bf16.mxu0 0
    %461 = vmatpush2.bf16.msra.mxu0 0
    %462 = vmatprep.mubr.bf16.mxu0 0
    %463 = vmatmul.mubr.bf16.gmra.mxu0 %v429
    %v464 = vpop.f32.mrf.mxu0
    %v465 = vadd.f32 0.0, %v464
    %v466 = vpop.f32.mrf.mxu0
    %v467 = vpop.f32.mrf.mxu0
    %v468 = vpop.f32.mrf.mxu0
    %469 = vdwg.mxu0
    %v470 = vadd.f32 %v230, %v465
    %v471 = vmul.f32 %v426, 0.9
    %v472 = vadd.f32 %v471, %v470
    %vm473 = vcmp.ge.f32.partialorder %v472, 0.5
    %v474 = vsel %vm473, 1, 0
    %v475 = vcvt.s32.f32 %v474
    %v476 = vmul.f32 %v475, 0.5
    %v477 = vsub.f32 %v472, %v476
    %v478 = vmul.f32 %v475, %v275
    %479 = vst [vmem:[#allocation10 + $0x18] sm:$0xff] %v478
    %v480 = vpack.c.bf16 %v478, %v478
    %481 = vmatprep.subr.bf16.mxu0 0
    %482 = vmatpush1.bf16.msra.mxu0 %v319
    %483 = vmatprep.subr.bf16.mxu0 0
    %484 = vmatpush1.bf16.msra.mxu0 %v318
    %485 = vmatprep.subr.bf16.mxu0 0
    %486 = vmatpush1.bf16.msra.mxu0 %v317
    %487 = vmatprep.subr.bf16.mxu0 0
    %488 = vmatpush1.bf16.msra.mxu0 %v316
    %489 = vmatprep.subr.bf16.mxu0 0
    %490 = vmatpush1.bf16.msra.mxu0 %v315
    %491 = vmatprep.subr.bf16.mxu0 0
    %492 = vmatpush1.bf16.msra.mxu0 %v314
    %493 = vmatprep.subr.bf16.mxu0 0
    %494 = vmatpush1.bf16.msra.mxu0 %v313
    %495 = vmatprep.subr.bf16.mxu0 0
    %496 = vmatpush1.bf16.msra.mxu0 %v312
    %497 = vmatprep.subr.bf16.mxu0 0
    %498 = vmatpush2.bf16.msra.mxu0 0
    %499 = vmatprep.subr.bf16.mxu0 0
    %500 = vmatpush2.bf16.msra.mxu0 0
    %501 = vmatprep.subr.bf16.mxu0 0
    %502 = vmatpush2.bf16.msra.mxu0 0
    %503 = vmatprep.subr.bf16.mxu0 0
    %504 = vmatpush2.bf16.msra.mxu0 0
    %505 = vmatprep.subr.bf16.mxu0 0
    %506 = vmatpush2.bf16.msra.mxu0 0
    %507 = vmatprep.subr.bf16.mxu0 0
    %508 = vmatpush2.bf16.msra.mxu0 0
    %509 = vmatprep.subr.bf16.mxu0 0
    %510 = vmatpush2.bf16.msra.mxu0 0
    %511 = vmatprep.subr.bf16.mxu0 0
    %512 = vmatpush2.bf16.msra.mxu0 0
    %513 = vmatprep.mubr.bf16.mxu0 0
    %514 = vmatmul.mubr.bf16.gmra.mxu0 %v480
    %v515 = vpop.f32.mrf.mxu0
    %v516 = vadd.f32 0.0, %v515
    %v517 = vpop.f32.mrf.mxu0
    %v518 = vpop.f32.mrf.mxu0
    %v519 = vpop.f32.mrf.mxu0
    %520 = vdwg.mxu0
    %v521 = vadd.f32 %v235, %v516
    %v522 = vmul.f32 %v477, 0.9
    %v523 = vadd.f32 %v522, %v521
    %vm524 = vcmp.ge.f32.partialorder %v523, 0.5
    %v525 = vsel %vm524, 1, 0
    %v526 = vcvt.s32.f32 %v525
    %v527 = vmul.f32 %v526, 0.5
    %v528 = vsub.f32 %v523, %v527
    %v529 = vmul.f32 %v526, %v275
    %530 = vst [vmem:[#allocation10 + $0x20] sm:$0xff] %v529
    %v531 = vpack.c.bf16 %v529, %v529
    %532 = vmatprep.subr.bf16.mxu0 0
    %533 = vmatpush1.bf16.msra.mxu0 %v319
    %534 = vmatprep.subr.bf16.mxu0 0
    %535 = vmatpush1.bf16.msra.mxu0 %v318
    %536 = vmatprep.subr.bf16.mxu0 0
    %537 = vmatpush1.bf16.msra.mxu0 %v317
    %538 = vmatprep.subr.bf16.mxu0 0
    %539 = vmatpush1.bf16.msra.mxu0 %v316
    %540 = vmatprep.subr.bf16.mxu0 0
    %541 = vmatpush1.bf16.msra.mxu0 %v315
    %542 = vmatprep.subr.bf16.mxu0 0
    %543 = vmatpush1.bf16.msra.mxu0 %v314
    %544 = vmatprep.subr.bf16.mxu0 0
    %545 = vmatpush1.bf16.msra.mxu0 %v313
    %546 = vmatprep.subr.bf16.mxu0 0
    %547 = vmatpush1.bf16.msra.mxu0 %v312
    %548 = vmatprep.subr.bf16.mxu0 0
    %549 = vmatpush2.bf16.msra.mxu0 0
    %550 = vmatprep.subr.bf16.mxu0 0
    %551 = vmatpush2.bf16.msra.mxu0 0
    %552 = vmatprep.subr.bf16.mxu0 0
    %553 = vmatpush2.bf16.msra.mxu0 0
    %554 = vmatprep.subr.bf16.mxu0 0
    %555 = vmatpush2.bf16.msra.mxu0 0
    %556 = vmatprep.subr.bf16.mxu0 0
    %557 = vmatpush2.bf16.msra.mxu0 0
    %558 = vmatprep.subr.bf16.mxu0 0
    %559 = vmatpush2.bf16.msra.mxu0 0
    %560 = vmatprep.subr.bf16.mxu0 0
    %561 = vmatpush2.bf16.msra.mxu0 0
    %562 = vmatprep.subr.bf16.mxu0 0
    %563 = vmatpush2.bf16.msra.mxu0 0
    %564 = vmatprep.mubr.bf16.mxu0 0
    %565 = vmatmul.mubr.bf16.gmra.mxu0 %v531
    %v566 = vpop.f32.mrf.mxu0
    %v567 = vadd.f32 0.0, %v566
    %v568 = vpop.f32.mrf.mxu0
    %v569 = vpop.f32.mrf.mxu0
    %v570 = vpop.f32.mrf.mxu0
    %571 = vdwg.mxu0
    %v572 = vadd.f32 %v238, %v567
    %v573 = vmul.f32 %v528, 0.9
    %v574 = vadd.f32 %v573, %v572
    %vm575 = vcmp.ge.f32.partialorder %v574, 0.5
    %v576 = vsel %vm575, 1, 0
    %v577 = vcvt.s32.f32 %v576
    %v578 = vmul.f32 %v577, 0.5
    %v579 = vsub.f32 %v574, %v578
    %v580 = vmul.f32 %v577, %v275
    %581 = vst [vmem:[#allocation10 + $0x28] sm:$0xff] %v580
    %v582 = vpack.c.bf16 %v580, %v580
    %583 = vmatprep.subr.bf16.mxu0 0
    %584 = vmatpush1.bf16.msra.mxu0 %v319
    %585 = vmatprep.subr.bf16.mxu0 0
    %586 = vmatpush1.bf16.msra.mxu0 %v318
    %587 = vmatprep.subr.bf16.mxu0 0
    %588 = vmatpush1.bf16.msra.mxu0 %v317
    %589 = vmatprep.subr.bf16.mxu0 0
    %590 = vmatpush1.bf16.msra.mxu0 %v316
    %591 = vmatprep.subr.bf16.mxu0 0
    %592 = vmatpush1.bf16.msra.mxu0 %v315
    %593 = vmatprep.subr.bf16.mxu0 0
    %594 = vmatpush1.bf16.msra.mxu0 %v314
    %595 = vmatprep.subr.bf16.mxu0 0
    %596 = vmatpush1.bf16.msra.mxu0 %v313
    %597 = vmatprep.subr.bf16.mxu0 0
    %598 = vmatpush1.bf16.msra.mxu0 %v312
    %599 = vmatprep.subr.bf16.mxu0 0
    %600 = vmatpush2.bf16.msra.mxu0 0
    %601 = vmatprep.subr.bf16.mxu0 0
    %602 = vmatpush2.bf16.msra.mxu0 0
    %603 = vmatprep.subr.bf16.mxu0 0
    %604 = vmatpush2.bf16.msra.mxu0 0
    %605 = vmatprep.subr.bf16.mxu0 0
    %606 = vmatpush2.bf16.msra.mxu0 0
    %607 = vmatprep.subr.bf16.mxu0 0
    %608 = vmatpush2.bf16.msra.mxu0 0
    %609 = vmatprep.subr.bf16.mxu0 0
    %610 = vmatpush2.bf16.msra.mxu0 0
    %611 = vmatprep.subr.bf16.mxu0 0
    %612 = vmatpush2.bf16.msra.mxu0 0
    %613 = vmatprep.subr.bf16.mxu0 0
    %614 = vmatpush2.bf16.msra.mxu0 0
    %615 = vmatprep.mubr.bf16.mxu0 0
    %616 = vmatmul.mubr.bf16.gmra.mxu0 %v582
    %v617 = vpop.f32.mrf.mxu0
    %v618 = vadd.f32 0.0, %v617
    %v619 = vpop.f32.mrf.mxu0
    %v620 = vpop.f32.mrf.mxu0
    %v621 = vpop.f32.mrf.mxu0
    %622 = vdwg.mxu0
    %v623 = vadd.f32 %v243, %v618
    %v624 = vmul.f32 %v579, 0.9
    %v625 = vadd.f32 %v624, %v623
    %vm626 = vcmp.ge.f32.partialorder %v625, 0.5
    %v627 = vsel %vm626, 1, 0
    %v628 = vcvt.s32.f32 %v627
    %v629 = vmul.f32 %v628, 0.5
    %v630 = vsub.f32 %v625, %v629
    %v631 = vmul.f32 %v628, %v275
    %632 = vst [vmem:[#allocation10 + $0x30] sm:$0xff] %v631
    %v633 = vpack.c.bf16 %v631, %v631
    %634 = vmatprep.subr.bf16.mxu0 0
    %635 = vmatpush1.bf16.msra.mxu0 %v319
    %636 = vmatprep.subr.bf16.mxu0 0
    %637 = vmatpush1.bf16.msra.mxu0 %v318
    %638 = vmatprep.subr.bf16.mxu0 0
    %639 = vmatpush1.bf16.msra.mxu0 %v317
    %640 = vmatprep.subr.bf16.mxu0 0
    %641 = vmatpush1.bf16.msra.mxu0 %v316
    %642 = vmatprep.subr.bf16.mxu0 0
    %643 = vmatpush1.bf16.msra.mxu0 %v315
    %644 = vmatprep.subr.bf16.mxu0 0
    %645 = vmatpush1.bf16.msra.mxu0 %v314
    %646 = vmatprep.subr.bf16.mxu0 0
    %647 = vmatpush1.bf16.msra.mxu0 %v313
    %648 = vmatprep.subr.bf16.mxu0 0
    %649 = vmatpush1.bf16.msra.mxu0 %v312
    %650 = vmatprep.subr.bf16.mxu0 0
    %651 = vmatpush2.bf16.msra.mxu0 0
    %652 = vmatprep.subr.bf16.mxu0 0
    %653 = vmatpush2.bf16.msra.mxu0 0
    %654 = vmatprep.subr.bf16.mxu0 0
    %655 = vmatpush2.bf16.msra.mxu0 0
    %656 = vmatprep.subr.bf16.mxu0 0
    %657 = vmatpush2.bf16.msra.mxu0 0
    %658 = vmatprep.subr.bf16.mxu0 0
    %659 = vmatpush2.bf16.msra.mxu0 0
    %660 = vmatprep.subr.bf16.mxu0 0
    %661 = vmatpush2.bf16.msra.mxu0 0
    %662 = vmatprep.subr.bf16.mxu0 0
    %663 = vmatpush2.bf16.msra.mxu0 0
    %664 = vmatprep.subr.bf16.mxu0 0
    %665 = vmatpush2.bf16.msra.mxu0 0
    %666 = vmatprep.mubr.bf16.mxu0 0
    %667 = vmatmul.mubr.bf16.gmra.mxu0 %v633
    %v668 = vpop.f32.mrf.mxu0
    %v669 = vadd.f32 0.0, %v668
    %v670 = vpop.f32.mrf.mxu0
    %v671 = vpop.f32.mrf.mxu0
    %v672 = vpop.f32.mrf.mxu0
    %673 = vdwg.mxu0
    %v674 = vadd.f32 %v246, %v669
    %v675 = vmul.f32 %v630, 0.9
    %v676 = vadd.f32 %v675, %v674
    %vm677 = vcmp.ge.f32.partialorder %v676, 0.5
    %v678 = vsel %vm677, 1, 0
    %v679 = vcvt.s32.f32 %v678
    %v680 = vmul.f32 %v679, 0.5
    %v681 = vsub.f32 %v676, %v680
    %v682 = vmul.f32 %v679, %v275
    %683 = vst [vmem:[#allocation10 + $0x38] sm:$0xff] %v682
    %684 = vst [vmem:[#allocation11] sm:$0xff] %v681
    // Predicated region
    $region38: #{tpu_custom_call.1} parent=1 // pred_check
      _
    $region39: #{tpu_custom_call.1} parent=1 // pred_check_branch
      %686 = sbr.rel (0) target = $region41
    $region40: #{tpu_custom_call.1} parent=1 // pred_region
      %s688 = ssub.s32 1024, 1024
      %689 = vsyncadd [#allocation4], %s688
      %s690 = sshll.u32 [#allocation10], 4
      %s691 = int_to_ptr.vmem [resolvable:$true] %s690
      %696 = dma.vmem_to_hbm [thread:$0]  %s691, 1024, %s5, [#allocation4], 128, 128, 8
    $region41: #{tpu_custom_call.1} parent=1 // pred_fallthru
      _
    // Predicated region
    $region42: #{tpu_custom_call.1} parent=1 // pred_check
      _
    $region43: #{tpu_custom_call.1} parent=1 // pred_check_branch
      %698 = sbr.rel (0) target = $region45
    $region44: #{tpu_custom_call.1} parent=1 // pred_region
      %s700 = ssub.s32 128, 128
      %701 = vsyncadd [#allocation12], %s700
      %s703 = sshll.u32 [#allocation11], 4
      %s704 = int_to_ptr.vmem [resolvable:$true] %s703
      %706 = dma.vmem_to_hbm [thread:$0]  %s704, 128, %s6, [#allocation12]
    $region45: #{tpu_custom_call.1} parent=1 // pred_fallthru
      _
    // Predicated region
    $region46: #{tpu_custom_call.1} parent=1 // pred_check
      _
    $region47: #{tpu_custom_call.1} parent=1 // pred_check_branch
      %708 = sbr.rel (0) target = $region49
    $region48: #{tpu_custom_call.1} parent=1 // pred_region
      %709 = dma.done [#allocation4], 1024
    $region49: #{tpu_custom_call.1} parent=1 // pred_fallthru
      _
    // Predicated region
    $region50: #{tpu_custom_call.1} parent=1 // pred_check
      _
    $region51: #{tpu_custom_call.1} parent=1 // pred_check_branch
      %711 = sbr.rel (0) target = $region53
    $region52: #{tpu_custom_call.1} parent=1 // pred_region
      %712 = dma.done [#allocation12], 128
    $region53: #{tpu_custom_call.1} parent=1 // pred_fallthru
      _
    %713 = vsyncpa [#allocation3], 1
    %714 = vsyncpa [#allocation6], 1
    %715 = vsyncpa [#allocation9], 1
    %716 = vsyncpa [#allocation4], 1
    %717 = vsyncpa [#allocation12], 1

</llo_original>
